<compile_context>
chip_gen: v5e
topology: v5e:2x2
jax: 0.10.0
libtpu: 0.0.40
codegen_flags: <defaults>
</compile_context>

<pallas_src>
import functools

import jax
import jax.numpy as jnp
from jax.experimental import pallas as pl
from jax.experimental.pallas import tpu as pltpu

LEAKY_SLOPE = 0.01   # PyTorch nn.LeakyReLU default
LN_EPS = 1e-5        # PyTorch nn.LayerNorm default
SUBLANE = 8          # TPU sublane count (f32)


def _round_up(x, m):
    return (x + m - 1) // m * m


def _leaky_relu(x):
    # max(x, slope*x) — single VPU select-free form
    return jnp.maximum(x, LEAKY_SLOPE * x)


def _layer_norm(x, gamma, beta):
    # Two-pass stats (matches PyTorch nn.LayerNorm, population variance).
    mean = jnp.mean(x, axis=-1, keepdims=True)
    d = x - mean
    var = jnp.mean(d * d, axis=-1, keepdims=True)
    inv = jax.lax.rsqrt(var + LN_EPS)   # EUP rsqrt
    return d * inv * gamma + beta


def controller_kernel(x_ref, w1_ref, w2_ref, w3_ref, vec_ref, o_ref,
                      *, h1, h2, action_dim):
    x = x_ref[...]

    # Packed small vectors: rows [b1, g1, be1, b2, g2, be2, b3], lane-padded to W.
    b1 = vec_ref[0:1, :h1]
    g1 = vec_ref[1:2, :h1]
    be1 = vec_ref[2:3, :h1]
    b2 = vec_ref[3:4, :h2]
    g2 = vec_ref[4:5, :h2]
    be2 = vec_ref[5:6, :h2]
    b3 = vec_ref[6:7, :action_dim]

    # Layer 1: Linear -> LeakyReLU -> LayerNorm
    h = jnp.dot(x, w1_ref[...], preferred_element_type=jnp.float32) + b1
    h = _leaky_relu(h)
    h = _layer_norm(h, g1, be1)

    # Layer 2: Linear -> LeakyReLU -> LayerNorm
    h = jnp.dot(h, w2_ref[...], preferred_element_type=jnp.float32) + b2
    h = _leaky_relu(h)
    h = _layer_norm(h, g2, be2)

    # Output head: Linear(action_dim) — unpadded narrow store (masked vst is cheap
    # compared to the 32x HBM writeback the 128-lane padding used to cost).
    out = jnp.dot(h, w3_ref[...], preferred_element_type=jnp.float32) + b3
    o_ref[...] = out.astype(o_ref.dtype)


def controller_forward(state, params, *, batch_tile=1024):
    """state: (B, state_dim) f32. params: dict of weights/biases/LN params (logical shapes)."""
    B, D = state.shape
    h1 = params["w1"].shape[1]
    h2 = params["w2"].shape[1]
    action_dim = params["w3"].shape[1]

    # --- pack the 7 small vectors into one (7, W) operand (lane-padded with zeros) ---
    W = max(h1, h2, action_dim)

    def pad_row(v):
        return jnp.pad(v, ((0, 0), (0, W - v.shape[1])))

    vec_packed = jnp.concatenate(
        [pad_row(params["b1"]), pad_row(params["g1"]), pad_row(params["be1"]),
         pad_row(params["b2"]), pad_row(params["g2"]), pad_row(params["be2"]),
         pad_row(params["b3"])], axis=0)          # (7, W)

    # --- sublane/tile-aligned batch: pad rows with zeros, slice back after ---
    pB0 = _round_up(B, SUBLANE)
    tb = _round_up(min(batch_tile, pB0), SUBLANE)
    pB = _round_up(pB0, tb)
    if pB != B:
        state = jnp.pad(state, ((0, pB - B), (0, 0)))

    grid = (pB // tb,)

    # Advisory cost hint so XLA schedules neighbouring work around this small call.
    flops = 2 * pB * (D * h1 + h1 * h2 + h2 * action_dim) + 12 * pB * (h1 + h2)
    bytes_accessed = 4 * (pB * D + pB * action_dim
                          + D * h1 + h1 * h2 + h2 * action_dim + 7 * W)
    cost = pl.CostEstimate(flops=flops, transcendentals=2 * pB,
                           bytes_accessed=bytes_accessed)

    def resident_spec(arr):
        shape = arr.shape
        # Full-array block; same block every grid step -> stays VMEM-resident.
        return pl.BlockSpec(shape, lambda i: (0,) * len(shape))

    kernel = functools.partial(controller_kernel, h1=h1, h2=h2, action_dim=action_dim)

    out_padded = pl.pallas_call(
        kernel,
        out_shape=jax.ShapeDtypeStruct((pB, action_dim), jnp.float32),
        grid=grid,
        in_specs=[
            pl.BlockSpec((tb, D), lambda i: (i, 0)),   # state, tiled over batch
            resident_spec(params["w1"]),
            resident_spec(params["w2"]),
            resident_spec(params["w3"]),
            resident_spec(vec_packed),
        ],
        out_specs=pl.BlockSpec((tb, action_dim), lambda i: (i, 0)),
        compiler_params=pltpu.CompilerParams(
            dimension_semantics=("parallel",)),
        cost_estimate=cost,
    )(state, params["w1"], params["w2"], params["w3"], vec_packed)

    if pB != B:
        out_padded = out_padded[:B]   # row-only slice; lanes are never padded
    return out_padded


def make_params(key, state_dim, hidden_units, action_dim):
    """Deterministic Kaiming-uniform-ish init (matches nn.Linear shapes)."""
    dims = [state_dim] + list(hidden_units) + [action_dim]
    names = ["1", "2", "3"]
    params = {}
    for i, nm in enumerate(names):
        fan_in, fan_out = dims[i], dims[i + 1]
        key, kw, kb = jax.random.split(key, 3)
        bound = 1.0 / jnp.sqrt(fan_in)
        # stored transposed vs torch (in, out) so kernel does x @ W
        params["w" + nm] = jax.random.uniform(
            kw, (fan_in, fan_out), jnp.float32, -bound, bound)
        params["b" + nm] = jax.random.uniform(
            kb, (1, fan_out), jnp.float32, -bound, bound)
    # LayerNorm affine params for the two hidden layers
    params["g1"] = jnp.ones((1, hidden_units[0]), jnp.float32)
    params["be1"] = jnp.zeros((1, hidden_units[0]), jnp.float32)
    params["g2"] = jnp.ones((1, hidden_units[1]), jnp.float32)
    params["be2"] = jnp.zeros((1, hidden_units[1]), jnp.float32)
    return params


def reference_forward(state, params):
    """Pure-JAX reference for correctness check."""
    def ln(x, g, b):
        mean = jnp.mean(x, axis=-1, keepdims=True)
        var = jnp.mean((x - mean) ** 2, axis=-1, keepdims=True)
        return (x - mean) * jax.lax.rsqrt(var + LN_EPS) * g + b

    h = state @ params["w1"] + params["b1"]
    h = jnp.where(h >= 0, h, LEAKY_SLOPE * h)
    h = ln(h, params["g1"], params["be1"])
    h = h @ params["w2"] + params["b2"]
    h = jnp.where(h >= 0, h, LEAKY_SLOPE * h)
    h = ln(h, params["g2"], params["be2"])
    return h @ params["w3"] + params["b3"]


if __name__ == "__main__":
    B, state_dim = 2, 8
    hidden_units = (32, 32)
    action_dim = 4

    key = jax.random.PRNGKey(0)
    key, kx = jax.random.split(key)
    state = jax.random.normal(kx, (B, state_dim), jnp.float32)
    params = make_params(key, state_dim, hidden_units, action_dim)

    fwd = jax.jit(functools.partial(controller_forward, batch_tile=1024))
    out = jax.block_until_ready(fwd(state, params))

    ref = reference_forward(state, params)
    assert out.shape == (B, action_dim)
    assert jnp.allclose(out, ref, atol=1e-4, rtol=1e-4), "mismatch vs reference"

    # Exercise the multi-tile (pipelined, weight-resident) grid path with an
    # intentionally small batch_tile and an unaligned batch size.
    fwd_multi = jax.jit(functools.partial(controller_forward, batch_tile=64))
    key, kx2 = jax.random.split(key)
    state_big = jax.random.normal(kx2, (300, state_dim), jnp.float32)
    out_big = jax.block_until_ready(fwd_multi(state_big, params))
    ref_big = reference_forward(state_big, params)
    assert out_big.shape == (300, action_dim)
    assert jnp.allclose(out_big, ref_big, atol=1e-4, rtol=1e-4), "mismatch vs reference (big batch)"

    print("KERNEL_OK")
</pallas_src>

<mosaic_0001>
module attributes {stable_mosaic.version = 11 : i64} {
  func.func @controller_kernel(%arg0: i32, %arg1: memref<8x8xf32, #tpu.memory_space<vmem>>, %arg2: memref<8x32xf32, #tpu.memory_space<vmem>>, %arg3: memref<32x32xf32, #tpu.memory_space<vmem>>, %arg4: memref<32x4xf32, #tpu.memory_space<vmem>>, %arg5: memref<7x32xf32, #tpu.memory_space<vmem>>, %arg6: memref<8x4xf32, #tpu.memory_space<vmem>>) attributes {dimension_semantics = [#tpu.dimension_semantics<parallel>], iteration_bounds = array<i64: 1>, scalar_prefetch = 0 : i64, scratch_operands = 0 : i64, tpu.core_type = #tpu.core_type<tc>, window_params = [{transform_indices = @transform_0, window_bounds = array<i64: 8, 8>}, {pipeline_mode = #tpu.pipeline_mode<synchronous>, transform_indices = @transform_1, window_bounds = array<i64: 8, 32>}, {pipeline_mode = #tpu.pipeline_mode<synchronous>, transform_indices = @transform_2, window_bounds = array<i64: 32, 32>}, {pipeline_mode = #tpu.pipeline_mode<synchronous>, transform_indices = @transform_3, window_bounds = array<i64: 32, 4>}, {pipeline_mode = #tpu.pipeline_mode<synchronous>, transform_indices = @transform_4, window_bounds = array<i64: 7, 32>}, {transform_indices = @transform_5, window_bounds = array<i64: 8, 4>}]} {
    %c0 = arith.constant 0 : index
    %c0_0 = arith.constant 0 : index
    %0 = vector.load %arg1[%c0, %c0_0] : memref<8x8xf32, #tpu.memory_space<vmem>>, vector<8x8xf32>
    %c0_1 = arith.constant 0 : index
    %c0_2 = arith.constant 0 : index
    %1 = vector.load %arg5[%c0_1, %c0_2] : memref<7x32xf32, #tpu.memory_space<vmem>>, vector<1x32xf32>
    %c1 = arith.constant 1 : index
    %c0_3 = arith.constant 0 : index
    %2 = vector.load %arg5[%c1, %c0_3] : memref<7x32xf32, #tpu.memory_space<vmem>>, vector<1x32xf32>
    %c2 = arith.constant 2 : index
    %c0_4 = arith.constant 0 : index
    %3 = vector.load %arg5[%c2, %c0_4] : memref<7x32xf32, #tpu.memory_space<vmem>>, vector<1x32xf32>
    %c3 = arith.constant 3 : index
    %c0_5 = arith.constant 0 : index
    %4 = vector.load %arg5[%c3, %c0_5] : memref<7x32xf32, #tpu.memory_space<vmem>>, vector<1x32xf32>
    %c4 = arith.constant 4 : index
    %c0_6 = arith.constant 0 : index
    %5 = vector.load %arg5[%c4, %c0_6] : memref<7x32xf32, #tpu.memory_space<vmem>>, vector<1x32xf32>
    %c5 = arith.constant 5 : index
    %c0_7 = arith.constant 0 : index
    %6 = vector.load %arg5[%c5, %c0_7] : memref<7x32xf32, #tpu.memory_space<vmem>>, vector<1x32xf32>
    %c6 = arith.constant 6 : index
    %c0_8 = arith.constant 0 : index
    %7 = vector.load %arg5[%c6, %c0_8] : memref<7x32xf32, #tpu.memory_space<vmem>>, vector<1x4xf32>
    %c0_9 = arith.constant 0 : index
    %c0_10 = arith.constant 0 : index
    %8 = vector.load %arg2[%c0_9, %c0_10] : memref<8x32xf32, #tpu.memory_space<vmem>>, vector<8x32xf32>
    %cst = arith.constant dense<0.000000e+00> : vector<8x32xf32>
    %9 = tpu.matmul %0, %8, %cst {dimension_numbers = #tpu.dot_dimension_numbers<[1], [0], [0], [1], [0, 0, 1, 1], [], []>} : vector<8x8xf32>, vector<8x32xf32>, vector<8x32xf32> -> vector<8x32xf32>
    %10 = vector.broadcast %1 : vector<1x32xf32> to vector<8x32xf32>
    %11 = arith.addf %9, %10 : vector<8x32xf32>
    %cst_11 = arith.constant 0.00999999977 : f32
    %12 = vector.broadcast %cst_11 : f32 to vector<8x32xf32>
    %13 = arith.mulf %12, %11 : vector<8x32xf32>
    %14 = arith.maximumf %11, %13 : vector<8x32xf32>
    %cst_12 = arith.constant dense<0.000000e+00> : vector<8xf32>
    %15 = vector.multi_reduction <add>, %14, %cst_12 [1] : vector<8x32xf32> to vector<8xf32>
    %16 = vector.shape_cast %15 : vector<8xf32> to vector<8x1xf32>
    %cst_13 = arith.constant 3.200000e+01 : f32
    %17 = vector.broadcast %cst_13 : f32 to vector<8x1xf32>
    %18 = arith.divf %16, %17 : vector<8x1xf32>
    %19 = vector.broadcast %18 : vector<8x1xf32> to vector<8x32xf32>
    %20 = arith.subf %14, %19 : vector<8x32xf32>
    %21 = arith.mulf %20, %20 : vector<8x32xf32>
    %cst_14 = arith.constant dense<0.000000e+00> : vector<8xf32>
    %22 = vector.multi_reduction <add>, %21, %cst_14 [1] : vector<8x32xf32> to vector<8xf32>
    %23 = vector.shape_cast %22 : vector<8xf32> to vector<8x1xf32>
    %cst_15 = arith.constant 3.200000e+01 : f32
    %24 = vector.broadcast %cst_15 : f32 to vector<8x1xf32>
    %25 = arith.divf %23, %24 : vector<8x1xf32>
    %cst_16 = arith.constant 9.99999974E-6 : f32
    %26 = vector.broadcast %cst_16 : f32 to vector<8x1xf32>
    %27 = arith.addf %25, %26 : vector<8x1xf32>
    %28 = math.rsqrt %27 : vector<8x1xf32>
    %29 = vector.broadcast %28 : vector<8x1xf32> to vector<8x32xf32>
    %30 = arith.mulf %20, %29 : vector<8x32xf32>
    %31 = vector.broadcast %2 : vector<1x32xf32> to vector<8x32xf32>
    %32 = arith.mulf %30, %31 : vector<8x32xf32>
    %33 = vector.broadcast %3 : vector<1x32xf32> to vector<8x32xf32>
    %34 = arith.addf %32, %33 : vector<8x32xf32>
    %c0_17 = arith.constant 0 : index
    %c0_18 = arith.constant 0 : index
    %35 = vector.load %arg3[%c0_17, %c0_18] : memref<32x32xf32, #tpu.memory_space<vmem>>, vector<32x32xf32>
    %cst_19 = arith.constant dense<0.000000e+00> : vector<8x32xf32>
    %36 = tpu.matmul %34, %35, %cst_19 {dimension_numbers = #tpu.dot_dimension_numbers<[1], [0], [0], [1], [0, 0, 1, 1], [], []>} : vector<8x32xf32>, vector<32x32xf32>, vector<8x32xf32> -> vector<8x32xf32>
    %37 = vector.broadcast %4 : vector<1x32xf32> to vector<8x32xf32>
    %38 = arith.addf %36, %37 : vector<8x32xf32>
    %cst_20 = arith.constant 0.00999999977 : f32
    %39 = vector.broadcast %cst_20 : f32 to vector<8x32xf32>
    %40 = arith.mulf %39, %38 : vector<8x32xf32>
    %41 = arith.maximumf %38, %40 : vector<8x32xf32>
    %cst_21 = arith.constant dense<0.000000e+00> : vector<8xf32>
    %42 = vector.multi_reduction <add>, %41, %cst_21 [1] : vector<8x32xf32> to vector<8xf32>
    %43 = vector.shape_cast %42 : vector<8xf32> to vector<8x1xf32>
    %cst_22 = arith.constant 3.200000e+01 : f32
    %44 = vector.broadcast %cst_22 : f32 to vector<8x1xf32>
    %45 = arith.divf %43, %44 : vector<8x1xf32>
    %46 = vector.broadcast %45 : vector<8x1xf32> to vector<8x32xf32>
    %47 = arith.subf %41, %46 : vector<8x32xf32>
    %48 = arith.mulf %47, %47 : vector<8x32xf32>
    %cst_23 = arith.constant dense<0.000000e+00> : vector<8xf32>
    %49 = vector.multi_reduction <add>, %48, %cst_23 [1] : vector<8x32xf32> to vector<8xf32>
    %50 = vector.shape_cast %49 : vector<8xf32> to vector<8x1xf32>
    %cst_24 = arith.constant 3.200000e+01 : f32
    %51 = vector.broadcast %cst_24 : f32 to vector<8x1xf32>
    %52 = arith.divf %50, %51 : vector<8x1xf32>
    %cst_25 = arith.constant 9.99999974E-6 : f32
    %53 = vector.broadcast %cst_25 : f32 to vector<8x1xf32>
    %54 = arith.addf %52, %53 : vector<8x1xf32>
    %55 = math.rsqrt %54 : vector<8x1xf32>
    %56 = vector.broadcast %55 : vector<8x1xf32> to vector<8x32xf32>
    %57 = arith.mulf %47, %56 : vector<8x32xf32>
    %58 = vector.broadcast %5 : vector<1x32xf32> to vector<8x32xf32>
    %59 = arith.mulf %57, %58 : vector<8x32xf32>
    %60 = vector.broadcast %6 : vector<1x32xf32> to vector<8x32xf32>
    %61 = arith.addf %59, %60 : vector<8x32xf32>
    %c0_26 = arith.constant 0 : index
    %c0_27 = arith.constant 0 : index
    %62 = vector.load %arg4[%c0_26, %c0_27] : memref<32x4xf32, #tpu.memory_space<vmem>>, vector<32x4xf32>
    %cst_28 = arith.constant dense<0.000000e+00> : vector<8x4xf32>
    %63 = tpu.matmul %61, %62, %cst_28 {dimension_numbers = #tpu.dot_dimension_numbers<[1], [0], [0], [1], [0, 0, 1, 1], [], []>} : vector<8x32xf32>, vector<32x4xf32>, vector<8x4xf32> -> vector<8x4xf32>
    %64 = vector.broadcast %7 : vector<1x4xf32> to vector<8x4xf32>
    %65 = arith.addf %63, %64 : vector<8x4xf32>
    %c0_29 = arith.constant 0 : index
    %c0_30 = arith.constant 0 : index
    %66 = vector.load %arg6[%c0_29, %c0_30] : memref<8x4xf32, #tpu.memory_space<vmem>>, vector<8x4xf32>
    tpu.vector_store %arg6[%c0_29, %c0_30], %65 {strides = array<i32>} : memref<8x4xf32, #tpu.memory_space<vmem>>, vector<8x4xf32>,
    return
  }
  func.func @transform_0(%arg0: i32) -> (i32, i32) {
    %c0_i32 = arith.constant 0 : i32
    %c0_i32_0 = arith.constant 0 : i32
    return %arg0, %c0_i32 : i32, i32
  }
  func.func @transform_1(%arg0: i32) -> (i32, i32) {
    %c0_i32 = arith.constant 0 : i32
    %c0_i32_0 = arith.constant 0 : i32
    %c0_i32_1 = arith.constant 0 : i32
    return %c0_i32, %c0_i32_0 : i32, i32
  }
  func.func @transform_2(%arg0: i32) -> (i32, i32) {
    %c0_i32 = arith.constant 0 : i32
    %c0_i32_0 = arith.constant 0 : i32
    %c0_i32_1 = arith.constant 0 : i32
    return %c0_i32, %c0_i32_0 : i32, i32
  }
  func.func @transform_3(%arg0: i32) -> (i32, i32) {
    %c0_i32 = arith.constant 0 : i32
    %c0_i32_0 = arith.constant 0 : i32
    %c0_i32_1 = arith.constant 0 : i32
    return %c0_i32, %c0_i32_0 : i32, i32
  }
  func.func @transform_4(%arg0: i32) -> (i32, i32) {
    %c0_i32 = arith.constant 0 : i32
    %c0_i32_0 = arith.constant 0 : i32
    %c0_i32_1 = arith.constant 0 : i32
    return %c0_i32, %c0_i32_0 : i32, i32
  }
  func.func @transform_5(%arg0: i32) -> (i32, i32) {
    %c0_i32 = arith.constant 0 : i32
    %c0_i32_0 = arith.constant 0 : i32
    return %arg0, %c0_i32 : i32, i32
  }
}

</mosaic_0001>

<llo_original>
// kernel: controller_forward.1
$region0: #{controller_forward.1}
  #allocation0 [shape = 'u32[]', space=smem, size = 0x4, offset = 0x4, fixed_abs, tag = 'smem constant byte address 0x4 - core index']
  #allocation1 [shape = 'u32[72,128]{1,0:T(1,128)}', space=vmem, size = 0x9000, scoped, tag = 'internal scratch']
  %s0 = inlined_call_operand.vmem [shape: f32[8,8], index: 0, kind: input, shape index: {}]
  %s1 = inlined_call_operand.vmem [shape: f32[8,32], index: 1, kind: input, shape index: {}]
  %s2 = inlined_call_operand.vmem [shape: f32[32,32], index: 2, kind: input, shape index: {}]
  %s3 = inlined_call_operand.vmem [shape: f32[32,4], index: 3, kind: input, shape index: {}]
  %s4 = inlined_call_operand.vmem [shape: f32[7,32], index: 4, kind: input, shape index: {}]
  %s5 = inlined_call_operand.vmem [shape: f32[8,4], index: 5, kind: output, shape index: {}]
  %s6 = sld [smem:[#allocation0]]
  $region30: #{controller_forward.1} parent=0
    _
  %s8 = ssub.s32 1, %s6
  %s9 = scalar_select 0, %s8, %s6
  // Predicated region
  $region2: #{controller_forward.1} parent=0 // pred_check
    _
  $region3: #{controller_forward.1} parent=0 // pred_check_branch
    %11 = sbr.rel (0) target = $region5
  $region4: #{controller_forward.1} parent=0 // pred_region
    _
  $region5: #{controller_forward.1} parent=0 // pred_fallthru
    _
  // Predicated region
  $region6: #{controller_forward.1} parent=0 // pred_check
    _
  $region7: #{controller_forward.1} parent=0 // pred_check_branch
    %13 = sbr.rel (0) target = $region9
  $region8: #{controller_forward.1} parent=0 // pred_region
    _
  $region9: #{controller_forward.1} parent=0 // pred_fallthru
    _
  // Predicated region
  $region10: #{controller_forward.1} parent=0 // pred_check
    _
  $region11: #{controller_forward.1} parent=0 // pred_check_branch
    %15 = sbr.rel (0) target = $region13
  $region12: #{controller_forward.1} parent=0 // pred_region
    _
  $region13: #{controller_forward.1} parent=0 // pred_fallthru
    _
  // Predicated region
  $region14: #{controller_forward.1} parent=0 // pred_check
    _
  $region15: #{controller_forward.1} parent=0 // pred_check_branch
    %17 = sbr.rel (0) target = $region17
  $region16: #{controller_forward.1} parent=0 // pred_region
    _
  $region17: #{controller_forward.1} parent=0 // pred_fallthru
    _
  // Predicated region
  $region18: #{controller_forward.1} parent=0 // pred_check
    _
  $region19: #{controller_forward.1} parent=0 // pred_check_branch
    %19 = sbr.rel (0) target = $region21
  $region20: #{controller_forward.1} parent=0 // pred_region
    _
  $region21: #{controller_forward.1} parent=0 // pred_fallthru
    _
  %v20 = vld [vmem:[%s0] sm:$0xff]
  %v21 = vld [vmem:[%s4] sm:$0x1]
  %v22 = vld [vmem:[%s4 + $0x1] sm:$0x1]
  %v23 = vld [vmem:[%s4 + $0x2] sm:$0x1]
  %v24 = vld [vmem:[%s4 + $0x3] sm:$0x1]
  %v25 = vld [vmem:[%s4 + $0x4] sm:$0x1]
  %v26 = vld [vmem:[%s4 + $0x5] sm:$0x1]
  %v27 = vld [vmem:[%s4 + $0x6] sm:$0x1]
  %v28 = vld [vmem:[%s1] sm:$0xff]
  %v29 = vperm.slane %v21, 0
  %vm30 = vcmask 64512
  %v32 = vsel %vm30, %v20, 0
  %34 = vmatpush.msra.mxu0 0.0
  %35 = vmatpush.msra.mxu0 0.0
  %36 = vmatpush.msra.mxu0 0.0
  %37 = vmatpush.msra.mxu0 0.0
  %38 = vmatpush.msra.mxu0 0.0
  %39 = vmatpush.msra.mxu0 0.0
  %40 = vmatpush.msra.mxu0 0.0
  %41 = vmatpush.msra.mxu0 0.0
  %42 = vmatpush.msra.mxu0 0.0
  %43 = vmatpush.msra.mxu0 0.0
  %44 = vmatpush.msra.mxu0 0.0
  %45 = vmatpush.msra.mxu0 0.0
  %46 = vmatpush.msra.mxu0 0.0
  %47 = vmatpush.msra.mxu0 0.0
  %48 = vmatpush.msra.mxu0 0.0
  %49 = vmatpush.msra.mxu0 %v28
  %50 = vmatmul.f32.gmra.mxu0 %v32
  %v51 = vpop.f32.mrf.mxu0
  %v52 = vadd.f32 %v29, %v51
  %53 = vdwg.mxu0
  %v54 = vmul.f32 %v52, 0.01
  %v55 = vmax.f32 %v52, %v54
  %vm56 = vcmask 261120
  %v57 = vsel %vm56, %v55, 0.0
  %58 = vadd.xlane.f32.xlu0 %v57
  %v59 = vpop.xlane.xlu0 %58
  %v60 = vrcp.pop 32.0
  %v61 = vmul.f32 32.0, %v60
  %v62 = vsub.f32 1.0, %v61
  %v63 = vmul.f32 %v60, %v62
  %v64 = vadd.f32 %v60, %v63
  %vm65 = vweird.f32 %v60
  %v66 = vsel %vm65, %v60, %v64
  %v67 = vmul.f32 %v59, %v66
  %v68 = vsub.f32 %v55, %v67
  %v69 = vmul.f32 %v68, %v68
  %v70 = vsel %vm56, %v69, 0.0
  %71 = vadd.xlane.f32.xlu0 %v70
  %v72 = vpop.xlane.xlu0 %71
  %v73 = vmul.f32 %v72, %v66
  %v74 = vadd.f32 %v73, 1e-05
  %v75 = vrsqrt.pop %v74
  %v76 = vmul.f32 %v75, %v74
  %v77 = vmul.f32 %v76, %v75
  %v78 = vmul.f32 0.5, %v77
  %v79 = vsub.f32 1.5, %v78
  %v80 = vmul.f32 %v75, %v79
  %vm81 = vweird.f32 %v74
  %vm82 = vweird.f32 %v75
  %vm83 = vmor %vm81, %vm82
  %v84 = vsel %vm83, %v75, %v80
  %v85 = vmul.f32 %v68, %v84
  %v86 = vperm.slane %v22, 0
  %v87 = vmul.f32 %v85, %v86
  %v88 = vperm.slane %v23, 0
  %v89 = vadd.f32 %v87, %v88
  %v90 = vld [vmem:[%s2] sm:$0xff]
  %v91 = vld [vmem:[%s2 + $0x8] sm:$0xff]
  %v92 = vld [vmem:[%s2 + $0x10] sm:$0xff]
  %v93 = vld [vmem:[%s2 + $0x18] sm:$0xff]
  %v94 = vperm.slane %v24, 0
  %v96 = vsel %vm56, %v89, 0
  %98 = vmatpush.msra.mxu0 0.0
  %99 = vmatpush.msra.mxu0 0.0
  %100 = vmatpush.msra.mxu0 0.0
  %101 = vmatpush.msra.mxu0 0.0
  %102 = vmatpush.msra.mxu0 0.0
  %103 = vmatpush.msra.mxu0 0.0
  %104 = vmatpush.msra.mxu0 0.0
  %105 = vmatpush.msra.mxu0 0.0
  %106 = vmatpush.msra.mxu0 0.0
  %107 = vmatpush.msra.mxu0 0.0
  %108 = vmatpush.msra.mxu0 0.0
  %109 = vmatpush.msra.mxu0 0.0
  %110 = vmatpush.msra.mxu0 %v93
  %111 = vmatpush.msra.mxu0 %v92
  %112 = vmatpush.msra.mxu0 %v91
  %113 = vmatpush.msra.mxu0 %v90
  %114 = vmatmul.f32.gmra.mxu0 %v96
  %v115 = vpop.f32.mrf.mxu0
  %v116 = vadd.f32 %v94, %v115
  %117 = vdwg.mxu0
  %v118 = vmul.f32 %v116, 0.01
  %v119 = vmax.f32 %v116, %v118
  %v120 = vsel %vm56, %v119, 0.0
  %121 = vadd.xlane.f32.xlu0 %v120
  %v122 = vpop.xlane.xlu0 %121
  %v123 = vmul.f32 %v122, %v66
  %v124 = vsub.f32 %v119, %v123
  %v125 = vmul.f32 %v124, %v124
  %v126 = vsel %vm56, %v125, 0.0
  %127 = vadd.xlane.f32.xlu0 %v126
  %v128 = vpop.xlane.xlu0 %127
  %v129 = vmul.f32 %v128, %v66
  %v130 = vadd.f32 %v129, 1e-05
  %v131 = vrsqrt.pop %v130
  %v132 = vmul.f32 %v131, %v130
  %v133 = vmul.f32 %v132, %v131
  %v134 = vmul.f32 0.5, %v133
  %v135 = vsub.f32 1.5, %v134
  %v136 = vmul.f32 %v131, %v135
  %vm137 = vweird.f32 %v130
  %vm138 = vweird.f32 %v131
  %vm139 = vmor %vm137, %vm138
  %v140 = vsel %vm139, %v131, %v136
  %v141 = vmul.f32 %v124, %v140
  %v142 = vperm.slane %v25, 0
  %v143 = vmul.f32 %v141, %v142
  %v144 = vperm.slane %v26, 0
  %v145 = vadd.f32 %v143, %v144
  %v146 = vld [vmem:[%s3] sm:$0xff]
  %v147 = vld [vmem:[%s3 + $0x8] sm:$0xff]
  %v148 = vld [vmem:[%s3 + $0x10] sm:$0xff]
  %v149 = vld [vmem:[%s3 + $0x18] sm:$0xff]
  %v150 = vperm.slane %v27, 0
  %v152 = vsel %vm56, %v145, 0
  %154 = vmatpush.msra.mxu0 0.0
  %155 = vmatpush.msra.mxu0 0.0
  %156 = vmatpush.msra.mxu0 0.0
  %157 = vmatpush.msra.mxu0 0.0
  %158 = vmatpush.msra.mxu0 0.0
  %159 = vmatpush.msra.mxu0 0.0
  %160 = vmatpush.msra.mxu0 0.0
  %161 = vmatpush.msra.mxu0 0.0
  %162 = vmatpush.msra.mxu0 0.0
  %163 = vmatpush.msra.mxu0 0.0
  %164 = vmatpush.msra.mxu0 0.0
  %165 = vmatpush.msra.mxu0 0.0
  %166 = vmatpush.msra.mxu0 %v149
  %167 = vmatpush.msra.mxu0 %v148
  %168 = vmatpush.msra.mxu0 %v147
  %169 = vmatpush.msra.mxu0 %v146
  %170 = vmatmul.f32.gmra.mxu0 %v152
  %v171 = vpop.f32.mrf.mxu0
  %v172 = vadd.f32 %v150, %v171
  %173 = vdwg.mxu0
  %vm174 = vcmask 31744
  %175 = vst.msk [vmem:[%s5] sm:$0xff] %vm174, %v172
  // Predicated region
  $region22: #{controller_forward.1} parent=0 // pred_check
    _
  $region23: #{controller_forward.1} parent=0 // pred_check_branch
    %177 = sbr.rel (0) target = $region25
  $region24: #{controller_forward.1} parent=0 // pred_region
    _
  $region25: #{controller_forward.1} parent=0 // pred_fallthru
    _
  // Predicated region
  $region26: #{controller_forward.1} parent=0 // pred_check
    _
  $region27: #{controller_forward.1} parent=0 // pred_check_branch
    %179 = sbr.rel (0) target = $region29
  $region28: #{controller_forward.1} parent=0 // pred_region
    _
  $region29: #{controller_forward.1} parent=0 // pred_fallthru
    _

</llo_original>
